<compile_context>
chip_gen: v5e
topology: v5e:2x2
jax: 0.10.0
libtpu: 0.0.40
codegen_flags: <defaults>
</compile_context>

<pallas_src>
import functools

import jax
import jax.numpy as jnp
from jax import lax
from jax.experimental import pallas as pl
from jax.experimental.pallas import tpu as pltpu


def _round_up(x, m):
    return (x + m - 1) // m * m


# ----------------------------------------------------------------------------
# Kernel 1: spectral-norm power iteration -> u_new, v_new, inv_sigma (no W_norm)
#   w : (H, Wd)   flattened weight w_bar.view(out, -1), f32
#   u : (H, 1)    old u
#   v : (1, Wd)   old v
# PyTorch semantics (power_iterations = 1):
#   vl2 = W^T u_old ; ul2 = W v_old          (both use the OLD u / OLD v)
#   v_new = l2normalize(vl2) ; u_new = l2normalize(ul2)
#   sigma = u_new . (W v_new)
# ----------------------------------------------------------------------------
def _spectral_stats_kernel(w_ref, u_ref, v_ref, u_out_ref, v_out_ref, inv_sigma_ref):
    eps = jnp.float32(1e-12)
    w = w_ref[...]                       # (H, Wd) f32
    u = u_ref[...]                       # (H, 1)
    v = v_ref[...]                       # (1, Wd)

    # VPU multiply + XLU reduce instead of tiny-M/N MXU matvecs and .T transposes
    # (this kernel is serial latency ahead of the conv via the inv_sigma dep).
    vl2 = jnp.sum(w * u, axis=0, keepdims=True)      # (1, Wd) == W^T u_old
    ul2 = jnp.sum(w * v, axis=1, keepdims=True)      # (H, 1)  == W  v_old

    # l2normalize (== F.normalize): x / max(||x||, eps) == x * rsqrt(max(||x||^2, eps^2))
    v_new = vl2 * lax.rsqrt(jnp.maximum(jnp.sum(vl2 * vl2), eps * eps))
    u_new = ul2 * lax.rsqrt(jnp.maximum(jnp.sum(ul2 * ul2), eps * eps))

    wv = jnp.sum(w * v_new, axis=1, keepdims=True)   # (H, 1) == W v_new
    sigma = jnp.sum(u_new * wv, keepdims=True)       # (1, 1)

    u_out_ref[...] = u_new                           # (H, 1), no transpose
    v_out_ref[...] = v_new                           # (1, Wd)
    inv_sigma_ref[...] = 1.0 / sigma                 # fused into conv epilogue


def spectral_stats(w_flat, u, v):
    H, Wd = w_flat.shape
    full = lambda shape: pl.BlockSpec(shape, lambda: (0,) * len(shape))
    # TODO(synk): for flattened weights larger than VMEM, tile Wd with a
    # reduction grid axis and accumulate the row/col sums in scratch.
    return pl.pallas_call(
        _spectral_stats_kernel,
        out_shape=(
            jax.ShapeDtypeStruct((H, 1), jnp.float32),
            jax.ShapeDtypeStruct((1, Wd), jnp.float32),
            jax.ShapeDtypeStruct((1, 1), jnp.float32),
        ),
        grid_spec=pltpu.PrefetchScalarGridSpec(
            num_scalar_prefetch=0,
            grid=(),
            in_specs=[full((H, Wd)), full((H, 1)), full((1, Wd))],
            out_specs=[full((H, 1)), full((1, Wd)), full((1, 1))],
        ),
    )(w_flat, u.reshape(H, 1), v.reshape(1, Wd))


# ----------------------------------------------------------------------------
# Kernel 2: conv2d as batched lane-dense im2col matmul with fused 1/sigma + bias.
#   wn      : (Cout, Kp)        bf16 (Kp = Cin*KH*KW padded to mult. of 16) -- resident
#   patches : (N, Kp, OHW_pad)  bf16 -- gridded over (image, lane tile)
#   bias    : (Cout, 1)         f32  -- resident
#   inv_sig : (1, 1)            f32  -- SMEM scalar
#   out     : (N, Cout, OHW_pad) f32
# ----------------------------------------------------------------------------
def _conv_matmul_kernel(w_ref, p_ref, b_ref, inv_sigma_ref, o_ref):
    # out = (W / sigma) @ patches + bias; 1/sigma fused into the epilogue.
    # NOTE: padded K rows and padded OHW lanes are zero, so padded output
    # columns come out equal to `bias` and are sliced away by the wrapper —
    # do not rely on them being zero if an activation is ever fused here.
    acc = jnp.dot(w_ref[...], p_ref[...], preferred_element_type=jnp.float32)
    o_ref[...] = acc * inv_sigma_ref[0, 0] + b_ref[...]


def conv_im2col_matmul(wn_bf16, patches_bf16, bias_col, inv_sigma, *, tile_ohw):
    Cout, Kp = wn_bf16.shape
    N, Kp2, OHWp = patches_bf16.shape
    assert Kp2 == Kp and OHWp % tile_ohw == 0 and tile_ohw % 128 == 0
    grid = (N, OHWp // tile_ohw)

    # Explicit VMEM budget (v5e's scoped default is only 16 MiB): resident
    # weight/bias + double-buffered patch & output tiles, with generous slack,
    # clamped well below v7x's 64 MiB physical VMEM.
    tile_bytes = 2 * (Kp * tile_ohw * 2 + Cout * tile_ohw * 4)
    resident_bytes = Cout * Kp * 2 + Cout * 4
    vmem_limit = min(max(4 * (tile_bytes + resident_bytes), 32 * 1024 * 1024),
                     48 * 1024 * 1024)

    return pl.pallas_call(
        _conv_matmul_kernel,
        out_shape=jax.ShapeDtypeStruct((N, Cout, OHWp), jnp.float32),
        grid_spec=pltpu.PrefetchScalarGridSpec(
            num_scalar_prefetch=0,
            grid=grid,
            in_specs=[
                pl.BlockSpec((Cout, Kp), lambda n, t: (0, 0)),               # weight, resident
                pl.BlockSpec((None, Kp, tile_ohw), lambda n, t: (n, 0, t)),  # patch lane tile
                pl.BlockSpec((Cout, 1), lambda n, t: (0, 0)),                # bias col, resident
                pl.BlockSpec(memory_space=pltpu.MemorySpace.SMEM),           # inv_sigma scalar
            ],
            out_specs=pl.BlockSpec((None, Cout, tile_ohw), lambda n, t: (n, 0, t)),
        ),
        compiler_params=pltpu.CompilerParams(
            dimension_semantics=("parallel", "parallel"),  # disjoint tiles (v7x: 2 TCs)
            vmem_limit_bytes=vmem_limit,
        ),
    )(wn_bf16, patches_bf16, bias_col, inv_sigma)


# ----------------------------------------------------------------------------
# Glue: im2col with the batch axis kept explicit (no global transpose).
# Row order (Cin, KH, KW) matches w.view(Cout, -1) column order.
# ----------------------------------------------------------------------------
def im2col_batched(x, kh, kw, pad, oh, ow):
    N, C, H, W = x.shape
    xp = jnp.pad(x, ((0, 0), (0, 0), (pad, pad), (pad, pad)))
    taps = [xp[:, :, i:i + oh, j:j + ow] for i in range(kh) for j in range(kw)]
    pats = jnp.stack(taps, axis=2)                 # (N, C, kh*kw, oh, ow)
    return pats.reshape(N, C * kh * kw, oh * ow)   # (N, K, OHW)


# TODO(synk): drop the materialized im2col entirely — keep padded bf16 x in
# HBM (pl.ANY) and accumulate kh*kw shifted matmuls into an f32 VMEM scratch
# inside the conv kernel, removing the kh*kw (9x) HBM expansion of activations.

_MAX_TILE_OHW = 8192   # lanes per grid step (capped by per-image OH*OW)


# ----------------------------------------------------------------------------
# SpectralNorm(Conv2d) forward
# ----------------------------------------------------------------------------
@functools.partial(jax.jit, static_argnums=(5, 6, 7))
def spectral_norm_conv_forward(x, w_bar, bias, u, v, kh, kw, pad):
    N, Cin, H, W = x.shape
    Cout = w_bar.shape[0]
    OH = H + 2 * pad - kh + 1
    OW = W + 2 * pad - kw + 1
    OHW = OH * OW
    K = Cin * kh * kw

    # --- power iteration + 1/sigma (tiny, f32) ---
    w_flat = w_bar.reshape(Cout, K)                               # w.view(height, -1)
    u_new, v_new, inv_sigma = spectral_stats(w_flat, u, v)

    # --- im2col built directly in bf16; K padded to a multiple of 16 ---
    patches = im2col_batched(x.astype(jnp.bfloat16), kh, kw, pad, OH, OW)   # (N,K,OHW) bf16

    K_pad = _round_up(K, 16)
    # Lane tile: as large as possible and 128-aligned; halve it if needed so the
    # 'parallel' grid has >= 2 steps (keeps both v7x TensorCores busy).
    ohw128 = _round_up(OHW, 128)
    tile_ohw = min(_MAX_TILE_OHW, ohw128)
    if N * ((ohw128 + tile_ohw - 1) // tile_ohw) < 2 and ohw128 >= 256:
        tile_ohw = _round_up((ohw128 + 1) // 2, 128)
    OHW_pad = _round_up(OHW, tile_ohw)

    patches = jnp.pad(patches, ((0, 0), (0, K_pad - K), (0, OHW_pad - OHW)))
    wn = jnp.pad(w_flat.astype(jnp.bfloat16), ((0, 0), (0, K_pad - K)))

    out = conv_im2col_matmul(
        wn,                                                       # bf16 MXU inputs,
        patches,                                                  # f32 accumulation
        bias.reshape(Cout, 1).astype(jnp.float32),
        inv_sigma,
        tile_ohw=tile_ohw,
    )                                                             # (N, Cout, OHW_pad) f32

    out = out[:, :, :OHW].reshape(N, Cout, OH, OW)                # no output transpose
    return out, u_new.reshape(-1), v_new.reshape(-1)


def _l2normalize(a, eps=1e-12):
    return a / jnp.maximum(jnp.sqrt(jnp.sum(a * a)), eps)


if __name__ == "__main__":
    # SpectralNorm(nn.Conv2d(4, 8, kernel_size=3, padding=1))
    Cin, Cout, KH, KW, PAD = 4, 8, 3, 3, 1
    N, H, W = 2, 16, 16

    key = jax.random.PRNGKey(0)
    kx, kw_, kb, ku, kv = jax.random.split(key, 5)

    x = jax.random.normal(kx, (N, Cin, H, W), dtype=jnp.float32)
    w_bar = jax.random.normal(kw_, (Cout, Cin, KH, KW), dtype=jnp.float32) * 0.1
    bias = jax.random.normal(kb, (Cout,), dtype=jnp.float32) * 0.1
    # u, v buffers: normal(0,1) then l2-normalized (as in _make_params)
    u = _l2normalize(jax.random.normal(ku, (Cout,), dtype=jnp.float32))
    v = _l2normalize(jax.random.normal(kv, (Cin * KH * KW,), dtype=jnp.float32))

    out, u_new, v_new = spectral_norm_conv_forward(x, w_bar, bias, u, v, KH, KW, PAD)
    out = jax.block_until_ready(out)

    # --- reference in plain JAX f32 (same math as the PyTorch module) ---
    wf = w_bar.reshape(Cout, -1)
    v_ref = _l2normalize(wf.T @ u)          # from OLD u
    u_ref = _l2normalize(wf @ v)            # from OLD v (matches the module's loop)
    sigma = u_ref @ (wf @ v_ref)
    w_norm = w_bar / sigma
    ref = lax.conv_general_dilated(
        x, w_norm, window_strides=(1, 1), padding=((PAD, PAD), (PAD, PAD)),
        dimension_numbers=("NCHW", "OIHW", "NCHW"),
    ) + bias.reshape(1, Cout, 1, 1)

    # bf16 MXU inputs (f32 accumulate) vs. f32 reference -> loose tolerance
    assert jnp.allclose(out, ref, atol=5e-2, rtol=5e-2), float(jnp.max(jnp.abs(out - ref)))
    assert jnp.allclose(u_new, u_ref, atol=1e-5), float(jnp.max(jnp.abs(u_new - u_ref)))
    assert jnp.allclose(v_new, v_ref, atol=1e-5), float(jnp.max(jnp.abs(v_new - v_ref)))
    print("KERNEL_OK")
</pallas_src>

<mosaic_0001>
module attributes {stable_mosaic.version = 11 : i64} {
  func.func @_spectral_stats_kernel(%arg0: memref<8x36xf32, #tpu.memory_space<vmem>>, %arg1: memref<8x1xf32, #tpu.memory_space<vmem>>, %arg2: memref<1x36xf32, #tpu.memory_space<vmem>>, %arg3: memref<8x1xf32, #tpu.memory_space<vmem>>, %arg4: memref<1x36xf32, #tpu.memory_space<vmem>>, %arg5: memref<1x1xf32, #tpu.memory_space<vmem>>) attributes {dimension_semantics = [], scalar_prefetch = 0 : i64, scratch_operands = 0 : i64, tpu.core_type = #tpu.core_type<tc>} {
    %c0 = arith.constant 0 : index
    %c0_0 = arith.constant 0 : index
    %0 = vector.load %arg0[%c0, %c0_0] : memref<8x36xf32, #tpu.memory_space<vmem>>, vector<8x36xf32>
    %c0_1 = arith.constant 0 : index
    %c0_2 = arith.constant 0 : index
    %1 = vector.load %arg1[%c0_1, %c0_2] : memref<8x1xf32, #tpu.memory_space<vmem>>, vector<8x1xf32>
    %c0_3 = arith.constant 0 : index
    %c0_4 = arith.constant 0 : index
    %2 = vector.load %arg2[%c0_3, %c0_4] : memref<1x36xf32, #tpu.memory_space<vmem>>, vector<1x36xf32>
    %3 = vector.broadcast %1 : vector<8x1xf32> to vector<8x36xf32>
    %4 = arith.mulf %0, %3 : vector<8x36xf32>
    %cst = arith.constant dense<0.000000e+00> : vector<36xf32>
    %5 = vector.multi_reduction <add>, %4, %cst [0] : vector<8x36xf32> to vector<36xf32>
    %6 = vector.shape_cast %5 : vector<36xf32> to vector<1x36xf32>
    %7 = vector.broadcast %2 : vector<1x36xf32> to vector<8x36xf32>
    %8 = arith.mulf %0, %7 : vector<8x36xf32>
    %cst_5 = arith.constant dense<0.000000e+00> : vector<8xf32>
    %9 = vector.multi_reduction <add>, %8, %cst_5 [1] : vector<8x36xf32> to vector<8xf32>
    %10 = vector.shape_cast %9 : vector<8xf32> to vector<8x1xf32>
    %11 = arith.mulf %6, %6 : vector<1x36xf32>
    %12 = vector.shape_cast %11 : vector<1x36xf32> to vector<1x1x36xf32>
    %cst_6 = arith.constant dense<0.000000e+00> : vector<1xf32>
    %13 = vector.multi_reduction <add>, %12, %cst_6 [1, 2] : vector<1x1x36xf32> to vector<1xf32>
    %14 = vector.shape_cast %13 : vector<1xf32> to vector<1x1x1xf32>
    %15 = vector.extract %14[0, 0, 0] : f32 from vector<1x1x1xf32>
    %cst_7 = arith.constant 9.99999996E-13 : f32
    %cst_8 = arith.constant 9.99999996E-13 : f32
    %16 = arith.mulf %cst_7, %cst_8 : f32
    %17 = arith.maximumf %15, %16 : f32
    %18 = math.rsqrt %17 : f32
    %19 = vector.broadcast %18 : f32 to vector<1x36xf32>
    %20 = arith.mulf %6, %19 : vector<1x36xf32>
    %21 = arith.mulf %10, %10 : vector<8x1xf32>
    %22 = vector.shape_cast %21 : vector<8x1xf32> to vector<1x8x1xf32>
    %cst_9 = arith.constant dense<0.000000e+00> : vector<1xf32>
    %23 = vector.multi_reduction <add>, %22, %cst_9 [1, 2] : vector<1x8x1xf32> to vector<1xf32>
    %24 = vector.shape_cast %23 : vector<1xf32> to vector<1x1x1xf32>
    %25 = vector.extract %24[0, 0, 0] : f32 from vector<1x1x1xf32>
    %cst_10 = arith.constant 9.99999996E-13 : f32
    %cst_11 = arith.constant 9.99999996E-13 : f32
    %26 = arith.mulf %cst_10, %cst_11 : f32
    %27 = arith.maximumf %25, %26 : f32
    %28 = math.rsqrt %27 : f32
    %29 = vector.broadcast %28 : f32 to vector<8x1xf32>
    %30 = arith.mulf %10, %29 : vector<8x1xf32>
    %31 = vector.broadcast %20 : vector<1x36xf32> to vector<8x36xf32>
    %32 = arith.mulf %0, %31 : vector<8x36xf32>
    %cst_12 = arith.constant dense<0.000000e+00> : vector<8xf32>
    %33 = vector.multi_reduction <add>, %32, %cst_12 [1] : vector<8x36xf32> to vector<8xf32>
    %34 = vector.shape_cast %33 : vector<8xf32> to vector<8x1xf32>
    %35 = arith.mulf %30, %34 : vector<8x1xf32>
    %36 = vector.shape_cast %35 : vector<8x1xf32> to vector<1x8x1xf32>
    %cst_13 = arith.constant dense<0.000000e+00> : vector<1xf32>
    %37 = vector.multi_reduction <add>, %36, %cst_13 [1, 2] : vector<1x8x1xf32> to vector<1xf32>
    %38 = vector.shape_cast %37 : vector<1xf32> to vector<1x1x1xf32>
    %39 = vector.extract %38[0, 0, 0] : f32 from vector<1x1x1xf32>
    %40 = vector.broadcast %39 : f32 to vector<1x1xf32>
    %c0_14 = arith.constant 0 : index
    %c0_15 = arith.constant 0 : index
    %41 = vector.load %arg3[%c0_14, %c0_15] : memref<8x1xf32, #tpu.memory_space<vmem>>, vector<8x1xf32>
    tpu.vector_store %arg3[%c0_14, %c0_15], %30 {strides = array<i32>} : memref<8x1xf32, #tpu.memory_space<vmem>>, vector<8x1xf32>,
    %c0_16 = arith.constant 0 : index
    %c0_17 = arith.constant 0 : index
    %42 = vector.load %arg4[%c0_16, %c0_17] : memref<1x36xf32, #tpu.memory_space<vmem>>, vector<1x36xf32>
    tpu.vector_store %arg4[%c0_16, %c0_17], %20 {strides = array<i32>} : memref<1x36xf32, #tpu.memory_space<vmem>>, vector<1x36xf32>,
    %cst_18 = arith.constant 1.000000e+00 : f32
    %43 = vector.broadcast %cst_18 : f32 to vector<1x1xf32>
    %44 = arith.divf %43, %40 : vector<1x1xf32>
    %c0_19 = arith.constant 0 : index
    %c0_20 = arith.constant 0 : index
    %45 = vector.load %arg5[%c0_19, %c0_20] : memref<1x1xf32, #tpu.memory_space<vmem>>, vector<1x1xf32>
    tpu.vector_store %arg5[%c0_19, %c0_20], %44 {strides = array<i32>} : memref<1x1xf32, #tpu.memory_space<vmem>>, vector<1x1xf32>,
    return
  }
}

module attributes {stable_mosaic.version = 11 : i64} {
  func.func @_conv_matmul_kernel(%arg0: i32, %arg1: i32, %arg2: memref<8x48xbf16, #tpu.memory_space<vmem>>, %arg3: memref<1x48x256xbf16, #tpu.memory_space<vmem>>, %arg4: memref<8x1xf32, #tpu.memory_space<vmem>>, %arg5: memref<1x1xf32, #tpu.memory_space<smem>>, %arg6: memref<1x8x256xf32, #tpu.memory_space<vmem>>) attributes {dimension_semantics = [#tpu.dimension_semantics<parallel>, #tpu.dimension_semantics<parallel>], iteration_bounds = array<i64: 2, 1>, scalar_prefetch = 0 : i64, scratch_operands = 0 : i64, tpu.core_type = #tpu.core_type<tc>, window_params = [{pipeline_mode = #tpu.pipeline_mode<synchronous>, transform_indices = @transform_0, window_bounds = array<i64: 8, 48>}, {transform_indices = @transform_1, window_bounds = array<i64: 1, 48, 256>}, {pipeline_mode = #tpu.pipeline_mode<synchronous>, transform_indices = @transform_2, window_bounds = array<i64: 8, 1>}, {transform_indices = @transform_3, window_bounds = array<i64: 1, 1>}, {transform_indices = @transform_4, window_bounds = array<i64: 1, 8, 256>}]} {
    %c0 = arith.constant 0 : index
    %c0_0 = arith.constant 0 : index
    %0 = vector.load %arg2[%c0, %c0_0] : memref<8x48xbf16, #tpu.memory_space<vmem>>, vector<8x48xbf16>
    %c0_1 = arith.constant 0 : index
    %c0_2 = arith.constant 0 : index
    %c0_3 = arith.constant 0 : index
    %1 = vector.load %arg3[%c0_1, %c0_2, %c0_3] : memref<1x48x256xbf16, #tpu.memory_space<vmem>>, vector<1x48x256xbf16>
    %2 = vector.shape_cast %1 : vector<1x48x256xbf16> to vector<48x256xbf16>
    %cst = arith.constant dense<0.000000e+00> : vector<8x256xf32>
    %3 = tpu.matmul %0, %2, %cst {dimension_numbers = #tpu.dot_dimension_numbers<[1], [0], [0], [1], [0, 0, 1, 1], [], []>} : vector<8x48xbf16>, vector<48x256xbf16>, vector<8x256xf32> -> vector<8x256xf32>
    %c0_4 = arith.constant 0 : index
    %c0_5 = arith.constant 0 : index
    %4 = memref.load %arg5[%c0_4, %c0_5] : memref<1x1xf32, #tpu.memory_space<smem>>
    %5 = vector.broadcast %4 : f32 to vector<8x256xf32>
    %6 = arith.mulf %3, %5 : vector<8x256xf32>
    %c0_6 = arith.constant 0 : index
    %c0_7 = arith.constant 0 : index
    %7 = vector.load %arg4[%c0_6, %c0_7] : memref<8x1xf32, #tpu.memory_space<vmem>>, vector<8x1xf32>
    %8 = vector.broadcast %7 : vector<8x1xf32> to vector<8x256xf32>
    %9 = arith.addf %6, %8 : vector<8x256xf32>
    %c0_8 = arith.constant 0 : index
    %c0_9 = arith.constant 0 : index
    %c0_10 = arith.constant 0 : index
    %10 = vector.load %arg6[%c0_8, %c0_9, %c0_10] : memref<1x8x256xf32, #tpu.memory_space<vmem>>, vector<1x8x256xf32>
    %11 = vector.shape_cast %10 : vector<1x8x256xf32> to vector<8x256xf32>
    %12 = vector.shape_cast %9 : vector<8x256xf32> to vector<1x8x256xf32>
    tpu.vector_store %arg6[%c0_8, %c0_9, %c0_10], %12 {strides = array<i32>} : memref<1x8x256xf32, #tpu.memory_space<vmem>>, vector<1x8x256xf32>,
    return
  }
  func.func @transform_0(%arg0: i32, %arg1: i32) -> (i32, i32) {
    %c0_i32 = arith.constant 0 : i32
    %c0_i32_0 = arith.constant 0 : i32
    %c0_i32_1 = arith.constant 0 : i32
    return %c0_i32, %c0_i32_0 : i32, i32
  }
  func.func @transform_1(%arg0: i32, %arg1: i32) -> (i32, i32, i32) {
    %c0_i32 = arith.constant 0 : i32
    %c0_i32_0 = arith.constant 0 : i32
    return %arg0, %c0_i32, %arg1 : i32, i32, i32
  }
  func.func @transform_2(%arg0: i32, %arg1: i32) -> (i32, i32) {
    %c0_i32 = arith.constant 0 : i32
    %c0_i32_0 = arith.constant 0 : i32
    %c0_i32_1 = arith.constant 0 : i32
    return %c0_i32, %c0_i32_0 : i32, i32
  }
  func.func @transform_3(%arg0: i32, %arg1: i32) -> (i32, i32) {
    %c0_i32 = arith.constant 0 : i32
    %c0_i32_0 = arith.constant 0 : i32
    %c0_i32_1 = arith.constant 0 : i32
    return %c0_i32, %c0_i32_0 : i32, i32
  }
  func.func @transform_4(%arg0: i32, %arg1: i32) -> (i32, i32, i32) {
    %c0_i32 = arith.constant 0 : i32
    %c0_i32_0 = arith.constant 0 : i32
    return %arg0, %c0_i32, %arg1 : i32, i32, i32
  }
}

</mosaic_0001>

<llo_original>
// kernel: spectral_norm_conv_forward.2
$region0: #{spectral_norm_conv_forward.2}
  #allocation0 [shape = 'u32[]', space=smem, size = 0x4, offset = 0x4, fixed_abs, tag = 'smem constant byte address 0x4 - core index']
  #allocation1 [shape = 'u32[72,128]{1,0:T(1,128)}', space=vmem, size = 0x9000, scoped, tag = 'internal scratch']
  %s0 = inlined_call_operand.vmem [shape: f32[8,36], index: 0, kind: input, shape index: {}]
  %s1 = inlined_call_operand.vmem [shape: f32[8,1], index: 1, kind: input, shape index: {}]
  %s2 = inlined_call_operand.vmem [shape: f32[1,36], index: 2, kind: input, shape index: {}]
  %s3 = inlined_call_operand.vmem [shape: f32[8,1], index: 3, kind: output, shape index: {0}]
  %s4 = inlined_call_operand.hbm [shape: f32[1,36], index: 4, kind: output, shape index: {1}]
  %s5 = inlined_call_operand.hbm [shape: f32[1,1], index: 5, kind: output, shape index: {2}]
  %6 = xla_tuple %s3, %s4, %s5
  %s7 = sld [smem:[#allocation0]]
  $region38: #{spectral_norm_conv_forward.2} parent=0
    _
  %s9 = ssub.s32 1, %s7
  %s10 = scalar_select 0, %s9, %s7
  $region1: #{spectral_norm_conv_forward.2} parent=0
    #allocation2 [shape = 'u8[512]{0}', space=vmem, size = 0x400, scoped, tag = 'output window, operand 1, single buffered']
    #allocation3 [shape = 's32[1]{0}', space=sflag, size = 0x4, scoped, tag = 'scoped memory for spectral_norm_conv_forward.2']
    #allocation4 [shape = 'u8[512]{0}', space=vmem, size = 0x400, scoped, tag = 'output window, operand 2, single buffered']
    #allocation5 [shape = 's32[1]{0}', space=sflag, size = 0x4, scoped, tag = 'scoped memory for spectral_norm_conv_forward.2']
    %11 = vsyncpa [#allocation3], 0
    %12 = vsyncpa [#allocation5], 0
    // Predicated region
    $region2: #{spectral_norm_conv_forward.2} parent=1 // pred_check
      _
    $region3: #{spectral_norm_conv_forward.2} parent=1 // pred_check_branch
      %14 = sbr.rel (0) target = $region5
    $region4: #{spectral_norm_conv_forward.2} parent=1 // pred_region
      _
    $region5: #{spectral_norm_conv_forward.2} parent=1 // pred_fallthru
      _
    // Predicated region
    $region6: #{spectral_norm_conv_forward.2} parent=1 // pred_check
      _
    $region7: #{spectral_norm_conv_forward.2} parent=1 // pred_check_branch
      %16 = sbr.rel (0) target = $region9
    $region8: #{spectral_norm_conv_forward.2} parent=1 // pred_region
      _
    $region9: #{spectral_norm_conv_forward.2} parent=1 // pred_fallthru
      _
    // Predicated region
    $region10: #{spectral_norm_conv_forward.2} parent=1 // pred_check
      _
    $region11: #{spectral_norm_conv_forward.2} parent=1 // pred_check_branch
      %18 = sbr.rel (0) target = $region13
    $region12: #{spectral_norm_conv_forward.2} parent=1 // pred_region
      _
    $region13: #{spectral_norm_conv_forward.2} parent=1 // pred_fallthru
      _
    %v19 = vld [vmem:[%s0] sm:$0xff]
    %v20 = vld [vmem:[%s1] sm:$0xff]
    %v21 = vld [vmem:[%s2] sm:$0x1]
    %23 = vset.pattern.permute.xlu0 0
    %24 = vperm.xlu0 %23, %v20
    %v25 = vpop.permute.xlu0 %24
    %v27 = vmul.f32 %v19, %v25
    %vm28 = vcmask 293888
    %v29 = vsel %vm28, %v27, 0.0
    %v30 = vrot.slane %v29, 4
    %v31 = vadd.f32 %v29, %v30
    %v32 = vrot.slane %v31, 2
    %v33 = vadd.f32 %v31, %v32
    %v34 = vrot.slane %v33, 1
    %v35 = vadd.f32 %v33, %v34
    %v37 = vperm.slane %v21, 0
    %v39 = vmul.f32 %v19, %v37
    %v40 = vsel %vm28, %v39, 0.0
    %41 = vadd.xlane.f32.xlu0 %v40
    %v42 = vpop.xlane.xlu0 %41
    %v43 = vmul.f32 %v35, %v35
    %vm44 = vcmask 286720
    %v45 = vsel %vm44, %v43, 0.0
    %46 = vadd.xlane.f32.xlu0 %v45
    %v47 = vpop.xlane.xlu0 %46
    %v48 = vrot.slane %v47, 4
    %v49 = vadd.f32 %v47, %v48
    %v50 = vrot.slane %v49, 2
    %v51 = vadd.f32 %v49, %v50
    %v52 = vrot.slane %v51, 1
    %v53 = vadd.f32 %v51, %v52
    %s54 = vtos %v53
    %s55 = smax.f32 %s54, 1e-24
    %v56 = vstv %s55
    %v57 = vrsqrt.pop %v56
    %v58 = vmul.f32 %v57, %v56
    %v59 = vmul.f32 %v58, %v57
    %v60 = vmul.f32 0.5, %v59
    %v61 = vsub.f32 1.5, %v60
    %v62 = vmul.f32 %v57, %v61
    %vm63 = vweird.f32 %v56
    %vm64 = vweird.f32 %v57
    %vm65 = vmor %vm63, %vm64
    %v66 = vsel %vm65, %v57, %v62
    %s67 = vtos %v66
    %v68 = vstv %s67
    %v69 = vmul.f32 %v35, %v68
    %v70 = vmul.f32 %v42, %v42
    %vm71 = vcmask 7168
    %v72 = vsel %vm71, %v70, 0.0
    %73 = vadd.xlane.f32.xlu0 %v72
    %v74 = vpop.xlane.xlu0 %73
    %v75 = vrot.slane %v74, 4
    %v76 = vadd.f32 %v74, %v75
    %v77 = vrot.slane %v76, 2
    %v78 = vadd.f32 %v76, %v77
    %v79 = vrot.slane %v78, 1
    %v80 = vadd.f32 %v78, %v79
    %s81 = vtos %v80
    %s82 = smax.f32 %s81, 1e-24
    %v83 = vstv %s82
    %v84 = vrsqrt.pop %v83
    %v85 = vmul.f32 %v84, %v83
    %v86 = vmul.f32 %v85, %v84
    %v87 = vmul.f32 0.5, %v86
    %v88 = vsub.f32 1.5, %v87
    %v89 = vmul.f32 %v84, %v88
    %vm90 = vweird.f32 %v83
    %vm91 = vweird.f32 %v84
    %vm92 = vmor %vm90, %vm91
    %v93 = vsel %vm92, %v84, %v89
    %s94 = vtos %v93
    %v95 = vstv %s94
    %v96 = vmul.f32 %v42, %v95
    %v97 = vmul.f32 %v19, %v69
    %v98 = vsel %vm28, %v97, 0.0
    %99 = vadd.xlane.f32.xlu0 %v98
    %v100 = vpop.xlane.xlu0 %99
    %v101 = vmul.f32 %v96, %v100
    %v102 = vsel %vm71, %v101, 0.0
    %103 = vadd.xlane.f32.xlu0 %v102
    %v104 = vpop.xlane.xlu0 %103
    %v105 = vrot.slane %v104, 4
    %v106 = vadd.f32 %v104, %v105
    %v107 = vrot.slane %v106, 2
    %v108 = vadd.f32 %v106, %v107
    %v109 = vrot.slane %v108, 1
    %v110 = vadd.f32 %v108, %v109
    %s111 = vtos %v110
    %v112 = vstv %s111
    %113 = vst.msk [vmem:[%s3] sm:$0xff] %vm71, %v96
    %114 = vst.msk [vmem:[#allocation2] sm:$0x1] %vm44, %v69
    %v115 = vrcp.pop %v112
    %v116 = vmul.f32 %v112, %v115
    %v117 = vsub.f32 1.0, %v116
    %v118 = vmul.f32 %v115, %v117
    %v119 = vadd.f32 %v115, %v118
    %vm120 = vweird.f32 %v112
    %vm121 = vweird.f32 %v115
    %vm122 = vmor %vm120, %vm121
    %v123 = vsel %vm122, %v115, %v119
    %v124 = vand.u32 2147483647, %v112
    %vm125 = vcmp.eq.f32.partialorder %v124, 8.507059e+37
    %v126 = vand.u32 %v112, 2147483648
    %v127 = vor.u32 1.1754944e-38, %v126
    %v128 = vsel %vm125, %v127, %v123
    %v129 = vmul.f32 1.0, %v128
    %vm130 = vcmask 0
    %131 = vst.msk [vmem:[#allocation4] sm:$0x1] %vm130, %v129
    // Predicated region
    $region14: #{spectral_norm_conv_forward.2} parent=1 // pred_check
      _
    $region15: #{spectral_norm_conv_forward.2} parent=1 // pred_check_branch
      %133 = sbr.rel (0) target = $region17
    $region16: #{spectral_norm_conv_forward.2} parent=1 // pred_region
      _
    $region17: #{spectral_norm_conv_forward.2} parent=1 // pred_fallthru
      _
    // Predicated region
    $region18: #{spectral_norm_conv_forward.2} parent=1 // pred_check
      _
    $region19: #{spectral_norm_conv_forward.2} parent=1 // pred_check_branch
      %135 = sbr.rel (0) target = $region21
    $region20: #{spectral_norm_conv_forward.2} parent=1 // pred_region
      %137 = vsyncadd [#allocation3], 0
      %s139 = sshll.u32 [#allocation2], 4
      %s140 = int_to_ptr.vmem [resolvable:$true] %s139
      %s141 = sshll.u32 %s4, 4
      %s142 = int_to_ptr.hbm [resolvable:$true] %s141
      %144 = dma.vmem_to_hbm [thread:$0]  %s140, 16, %s142, [#allocation3]
    $region21: #{spectral_norm_conv_forward.2} parent=1 // pred_fallthru
      _
    // Predicated region
    $region22: #{spectral_norm_conv_forward.2} parent=1 // pred_check
      _
    $region23: #{spectral_norm_conv_forward.2} parent=1 // pred_check_branch
      %146 = sbr.rel (0) target = $region25
    $region24: #{spectral_norm_conv_forward.2} parent=1 // pred_region
      %148 = vsyncadd [#allocation5], 0
      %s150 = sshll.u32 [#allocation4], 4
      %s151 = int_to_ptr.vmem [resolvable:$true] %s150
      %s152 = sshll.u32 %s5, 4
      %s153 = int_to_ptr.hbm [resolvable:$true] %s152
      %155 = dma.vmem_to_hbm [thread:$0]  %s151, 16, %s153, [#allocation5]
    $region25: #{spectral_norm_conv_forward.2} parent=1 // pred_fallthru
      _
    // Predicated region
    $region26: #{spectral_norm_conv_forward.2} parent=1 // pred_check
      _
    $region27: #{spectral_norm_conv_forward.2} parent=1 // pred_check_branch
      %157 = sbr.rel (0) target = $region29
    $region28: #{spectral_norm_conv_forward.2} parent=1 // pred_region
      _
    $region29: #{spectral_norm_conv_forward.2} parent=1 // pred_fallthru
      _
    // Predicated region
    $region30: #{spectral_norm_conv_forward.2} parent=1 // pred_check
      _
    $region31: #{spectral_norm_conv_forward.2} parent=1 // pred_check_branch
      %159 = sbr.rel (0) target = $region33
    $region32: #{spectral_norm_conv_forward.2} parent=1 // pred_region
      %161 = dma.done [#allocation3], 16
    $region33: #{spectral_norm_conv_forward.2} parent=1 // pred_fallthru
      _
    // Predicated region
    $region34: #{spectral_norm_conv_forward.2} parent=1 // pred_check
      _
    $region35: #{spectral_norm_conv_forward.2} parent=1 // pred_check_branch
      %163 = sbr.rel (0) target = $region37
    $region36: #{spectral_norm_conv_forward.2} parent=1 // pred_region
      %165 = dma.done [#allocation5], 16
    $region37: #{spectral_norm_conv_forward.2} parent=1 // pred_fallthru
      _
    %166 = vsyncpa [#allocation3], 1
    %167 = vsyncpa [#allocation5], 1

// kernel: spectral_norm_conv_forward.3
$region0: #{spectral_norm_conv_forward.3}
  #allocation0 [shape = 'u32[]', space=smem, size = 0x4, offset = 0x4, fixed_abs, tag = 'smem constant byte address 0x4 - core index']
  #allocation1 [shape = 'u32[72,128]{1,0:T(1,128)}', space=vmem, size = 0x9000, scoped, tag = 'internal scratch']
  #allocation2 [shape = 'f32[1,1]{1,0:T(1,128)S(6)}', space=smem, size = 0x200, scoped, tag = 'scoped memory for spectral_norm_conv_forward.3']
  %s0 = inlined_call_operand.vmem [shape: bf16[8,48], index: 0, kind: input, shape index: {}]
  %s1 = inlined_call_operand.vmem [shape: bf16[2,48,256], index: 1, kind: input, shape index: {}]
  %s2 = inlined_call_operand.vmem [shape: f32[8,1], index: 2, kind: input, shape index: {}]
  %s3 = inlined_call_operand.<no memory space> [shape: f32[1,1], index: 3, kind: input, shape index: {}]
  %s4 = inlined_call_operand.vmem [shape: f32[2,8,256], index: 4, kind: output, shape index: {}]
  %s5 = sld [smem:[#allocation0]]
  $region49: #{spectral_norm_conv_forward.3} parent=0
    _
  %s7 = ssub.s32 1, %s5
  %s8 = scalar_select 0, %s7, %s5
  %9 = sst [smem:[#allocation2]] %s3
  loop: start=0, step=1, limit=4
  $region2: #{spectral_norm_conv_forward.3} parent=0 // loop_pre_header
    _
  $region3: #{spectral_norm_conv_forward.3} parent=0 // loop_header
    %s11 = sphi 0, %s15
    %p12 = scmp.ge.s32.totalorder %s11, 4
    %s18 = sphi 0, %s30
    %s19 = sphi 0, %s26
    %s20 = sphi 0, %s18
    %s21 = sphi 0, %s19
    %s22 = sphi 0, %s20
    %s23 = sphi 0, %s21
    %s31 = sphi 0, %s31
    %s33 = sphi 0, %s31
    %s34 = sphi 0, %s33
    %s48 = sphi 0, %s34
    %s56 = sphi 0, %s58
    %s59 = sphi 0, %s56
    %s60 = sphi 0, %s59
    %s76 = sphi 0, %s60
    %s80 = sphi 0, %s80
    %s82 = sphi 0, %s80
    %s83 = sphi 0, %s82
    %s97 = sphi 0, %s83
    %s101 = sphi 0, %s101
    %s103 = sphi 0, %s101
    %s104 = sphi 0, %s103
    %s118 = sphi 0, %s104
    %s126 = sphi 0, %s128
    %s129 = sphi 0, %s126
    %s130 = sphi 0, %s129
    %s146 = sphi 0, %s130
  $region4: #{spectral_norm_conv_forward.3} parent=0 // loop_header_branch
    %14 = sbr.rel (%p12) target = $region8
  $region5: #{spectral_norm_conv_forward.3} parent=0 // loop_body
    %s16 = ssub.s32 %s11, 1
    %s17 = ssub.s32 %s11, 2
    %s24 = sadd.s32 1, %s19
    %p25 = scmp.ge.s32.totalorder %s24, 1
    %s26 = scalar_select %p25, 0, %s24
    %s27 = sadd.s32 1, %s18
    %s28 = scalar_select %p25, %s27, %s18
    %p29 = scmp.ge.s32.totalorder %s28, 2
    %s30 = scalar_select %p29, 0, %s28
    %s32 = sadd.s32 %s31, 1
    %p35 = scmp.eq.s32.totalorder %s11, 1
    %p36 = scmp.ne.s32.totalorder %s31, %s33
    %p37 = scmp.eq.s32.totalorder %s11, 0
    %p38 = por %p36, %p37
    %p39 = scmp.ne.s32.totalorder %s31, %s33
    %p40 = scmp.eq.s32.totalorder %s16, 1
    %p41 = por %p39, %p40
    %p42 = scmp.ne.s32.totalorder %s33, %s34
    %p43 = scmp.eq.s32.totalorder %s16, 0
    %p44 = por %p42, %p43
    %p45 = scmp.ne.s32.totalorder %s33, %s34
    %p46 = scmp.eq.s32.totalorder %s17, 1
    %p47 = por %p45, %p46
    %p49 = scmp.ne.s32.totalorder %s34, %s48
    %p50 = scmp.eq.s32.totalorder %s17, 0
    %p51 = por %p49, %p50
    %s52 = ssub.s32 %s18, %s30
    %s53 = ssub.s32 %s19, %s26
    %s54 = sor.u32 %s52, %s53
    %p55 = scmp.eq.s32.totalorder %s54, 0
    %s57 = sadd.s32 %s56, 1
    %s58 = scalar_select %p55, %s56, %s57
    %p61 = pneg %p55
    %p62 = scmp.eq.s32.totalorder %s11, 1
    %p63 = por %p61, %p62
    %p64 = scmp.ne.s32.totalorder %s56, %s59
    %p65 = scmp.eq.s32.totalorder %s11, 0
    %p66 = por %p64, %p65
    %p67 = scmp.ne.s32.totalorder %s56, %s59
    %p68 = scmp.eq.s32.totalorder %s16, 1
    %p69 = por %p67, %p68
    %p70 = scmp.ne.s32.totalorder %s59, %s60
    %p71 = scmp.eq.s32.totalorder %s16, 0
    %p72 = por %p70, %p71
    %p73 = scmp.ne.s32.totalorder %s59, %s60
    %p74 = scmp.eq.s32.totalorder %s17, 1
    %p75 = por %p73, %p74
    %p77 = scmp.ne.s32.totalorder %s60, %s76
    %p78 = scmp.eq.s32.totalorder %s17, 0
    %p79 = por %p77, %p78
    %s81 = sadd.s32 %s80, 1
    %p84 = scmp.eq.s32.totalorder %s11, 1
    %p85 = scmp.ne.s32.totalorder %s80, %s82
    %p86 = scmp.eq.s32.totalorder %s11, 0
    %p87 = por %p85, %p86
    %p88 = scmp.ne.s32.totalorder %s80, %s82
    %p89 = scmp.eq.s32.totalorder %s16, 1
    %p90 = por %p88, %p89
    %p91 = scmp.ne.s32.totalorder %s82, %s83
    %p92 = scmp.eq.s32.totalorder %s16, 0
    %p93 = por %p91, %p92
    %p94 = scmp.ne.s32.totalorder %s82, %s83
    %p95 = scmp.eq.s32.totalorder %s17, 1
    %p96 = por %p94, %p95
    %p98 = scmp.ne.s32.totalorder %s83, %s97
    %p99 = scmp.eq.s32.totalorder %s17, 0
    %p100 = por %p98, %p99
    %s102 = sadd.s32 %s101, 1
    %p105 = scmp.eq.s32.totalorder %s11, 1
    %p106 = scmp.ne.s32.totalorder %s101, %s103
    %p107 = scmp.eq.s32.totalorder %s11, 0
    %p108 = por %p106, %p107
    %p109 = scmp.ne.s32.totalorder %s101, %s103
    %p110 = scmp.eq.s32.totalorder %s16, 1
    %p111 = por %p109, %p110
    %p112 = scmp.ne.s32.totalorder %s103, %s104
    %p113 = scmp.eq.s32.totalorder %s16, 0
    %p114 = por %p112, %p113
    %p115 = scmp.ne.s32.totalorder %s103, %s104
    %p116 = scmp.eq.s32.totalorder %s17, 1
    %p117 = por %p115, %p116
    %p119 = scmp.ne.s32.totalorder %s104, %s118
    %p120 = scmp.eq.s32.totalorder %s17, 0
    %p121 = por %p119, %p120
    %s122 = ssub.s32 %s18, %s30
    %s123 = ssub.s32 %s19, %s26
    %s124 = sor.u32 %s122, %s123
    %p125 = scmp.eq.s32.totalorder %s124, 0
    %s127 = sadd.s32 %s126, 1
    %s128 = scalar_select %p125, %s126, %s127
    %p131 = pneg %p125
    %p132 = scmp.eq.s32.totalorder %s11, 1
    %p133 = por %p131, %p132
    %p134 = scmp.ne.s32.totalorder %s126, %s129
    %p135 = scmp.eq.s32.totalorder %s11, 0
    %p136 = por %p134, %p135
    %p137 = scmp.ne.s32.totalorder %s126, %s129
    %p138 = scmp.eq.s32.totalorder %s16, 1
    %p139 = por %p137, %p138
    %p140 = scmp.ne.s32.totalorder %s129, %s130
    %p141 = scmp.eq.s32.totalorder %s16, 0
    %p142 = por %p140, %p141
    %p143 = scmp.ne.s32.totalorder %s129, %s130
    %p144 = scmp.eq.s32.totalorder %s17, 1
    %p145 = por %p143, %p144
    %p147 = scmp.ne.s32.totalorder %s130, %s146
    %p148 = scmp.eq.s32.totalorder %s17, 0
    %p149 = por %p147, %p148
    %p150 = scmp.le.s32.totalorder 1, %s11
    %p151 = scmp.lt.s32.totalorder %s11, 3
    %p152 = pnand %p150, %p151
    %p153 = pneg %p152
    // Predicated region
    $region9: #{spectral_norm_conv_forward.3} parent=5 // pred_check
      _
    $region10: #{spectral_norm_conv_forward.3} parent=5 // pred_check_branch
      %155 = sbr.rel (%p152) target = $region12
    $region11: #{spectral_norm_conv_forward.3} parent=5 // pred_region
      %s156 = ssub.s32 %s11, 1
      // Predicated region
      $region13: #{spectral_norm_conv_forward.3} parent=11 // pred_check
        %p157 = pneg %p44
      $region14: #{spectral_norm_conv_forward.3} parent=11 // pred_check_branch
        %159 = sbr.rel (%p157) target = $region16
      $region15: #{spectral_norm_conv_forward.3} parent=11 // pred_region
        _
      $region16: #{spectral_norm_conv_forward.3} parent=11 // pred_fallthru
        _
      // Predicated region
      $region17: #{spectral_norm_conv_forward.3} parent=11 // pred_check
        %p160 = pneg %p93
      $region18: #{spectral_norm_conv_forward.3} parent=11 // pred_check_branch
        %162 = sbr.rel (%p160) target = $region20
      $region19: #{spectral_norm_conv_forward.3} parent=11 // pred_region
        _
      $region20: #{spectral_norm_conv_forward.3} parent=11 // pred_fallthru
        _
      // Predicated region
      $region21: #{spectral_norm_conv_forward.3} parent=11 // pred_check
        %p163 = pneg %p114
      $region22: #{spectral_norm_conv_forward.3} parent=11 // pred_check_branch
        %165 = sbr.rel (%p163) target = $region24
      $region23: #{spectral_norm_conv_forward.3} parent=11 // pred_region
        _
      $region24: #{spectral_norm_conv_forward.3} parent=11 // pred_fallthru
        _
    $region12: #{spectral_norm_conv_forward.3} parent=5 // pred_fallthru
      _
    %p166 = scmp.lt.s32.totalorder %s11, 2
    // Predicated region
    $region25: #{spectral_norm_conv_forward.3} parent=5 // pred_check
      %p167 = pneg %p166
    $region26: #{spectral_norm_conv_forward.3} parent=5 // pred_check_branch
      %169 = sbr.rel (%p167) target = $region28
    $region27: #{spectral_norm_conv_forward.3} parent=5 // pred_region
      // Predicated region
      $region29: #{spectral_norm_conv_forward.3} parent=27 // pred_check
        %p170 = pneg %p66
      $region30: #{spectral_norm_conv_forward.3} parent=27 // pred_check_branch
        %172 = sbr.rel (%p170) target = $region32
      $region31: #{spectral_norm_conv_forward.3} parent=27 // pred_region
        %s173 = smul.u32 2, %s19
        %p174 = scmp.lt.s32.totalorder %s18, 1
        %s175 = scalar_select %p174, %s18, 1
        %p176 = scmp.lt.s32.totalorder %s173, 1
        %s177 = scalar_select %p176, %s173, 1
        %s178 = smul.addr %s175, 12
        %s179 = sadd.s32 %s177, %s178
        %s180 = smul.addr %s179, 4
        %s181 = scalar_lea.vmem %s1, %s180
        %s182 = smul.u32 2, %s19
      $region32: #{spectral_norm_conv_forward.3} parent=27 // pred_fallthru
        _
    $region28: #{spectral_norm_conv_forward.3} parent=5 // pred_fallthru
      _
    %p183 = scmp.le.s32.totalorder 1, %s11
    %p184 = scmp.lt.s32.totalorder %s11, 3
    %p185 = pnand %p183, %p184
    %p186 = pneg %p185
    // Predicated region
    $region33: #{spectral_norm_conv_forward.3} parent=5 // pred_check
      _
    $region34: #{spectral_norm_conv_forward.3} parent=5 // pred_check_branch
      %188 = sbr.rel (%p185) target = $region36
    $region35: #{spectral_norm_conv_forward.3} parent=5 // pred_region
      %s189 = ssub.s32 %s11, 1
      %p190 = pneg %p44
      %p191 = pneg %p41
      %s192 = smul.u32 2, %s21
      %p193 = scmp.lt.s32.totalorder %s20, 1
      %s194 = scalar_select %p193, %s20, 1
      %p195 = scmp.lt.s32.totalorder %s192, 1
      %s196 = scalar_select %p195, %s192, 1
      %s197 = smul.addr %s194, 12
      %s198 = sadd.s32 %s196, %s197
      %s199 = smul.addr %s198, 4
      %s200 = scalar_lea.vmem %s1, %s199
      %p201 = pneg %p72
      %p202 = pneg %p69
      %p203 = pneg %p93
      %p204 = pneg %p90
      %p205 = pneg %p114
      %p206 = pneg %p111
      %p207 = pneg %p142
      %p208 = pneg %p139
      %s209 = smul.u32 2, %s21
      %p210 = scmp.lt.s32.totalorder %s20, 1
      %s211 = scalar_select %p210, %s20, 1
      %p212 = scmp.lt.s32.totalorder %s209, 1
      %s213 = scalar_select %p212, %s209, 1
      %s214 = smul.addr %s211, 2
      %s215 = sadd.s32 %s213, %s214
      %s216 = smul.addr %s215, 8
      %s217 = scalar_lea.vmem %s4, %s216
      %s218 = smul.u32 2, %s21
      %p219 = scmp.lt.s32.totalorder %s20, 1
      %s220 = scalar_select %p219, %s20, 1
      %p221 = scmp.lt.s32.totalorder %s218, 1
      %s222 = scalar_select %p221, %s218, 1
      %s223 = smul.addr %s220, 12
      %s224 = sadd.s32 %s222, %s223
      %s225 = smul.addr %s224, 4
      %s226 = scalar_lea.vmem %s1, %s225
      %s227 = smul.u32 2, %s21
      %s228 = smul.u32 2, %s21
      %p229 = scmp.lt.s32.totalorder %s20, 1
      %s230 = scalar_select %p229, %s20, 1
      %p231 = scmp.lt.s32.totalorder %s228, 1
      %s232 = scalar_select %p231, %s228, 1
      %s233 = smul.addr %s230, 2
      %s234 = sadd.s32 %s232, %s233
      %s235 = smul.addr %s234, 8
      %s236 = scalar_lea.vmem %s4, %s235
      %s237 = smul.u32 2, %s21
      %v239 = vld [vmem:[%s0] sm:$0xf]
      %v240 = vld [vmem:[%s226] sm:$0xff]
      %v241 = vld [vmem:[%s226 + $0x8] sm:$0xff]
      %v242 = vld [vmem:[%s226 + $0x10] sm:$0xff]
      %v243 = vld [vmem:[%s226 + $0x18] sm:$0xff]
      %v244 = vld [vmem:[%s226 + $0x20] sm:$0xff]
      %v245 = vld [vmem:[%s226 + $0x28] sm:$0xff]
      %v252 = vunpack.c.l.b16 %v240
      %v253 = vunpack.c.h.b16 %v240
      %v254 = vunpack.c.l.b16 %v241
      %v255 = vunpack.c.h.b16 %v241
      %v256 = vunpack.c.l.b16 %v242
      %v257 = vunpack.c.h.b16 %v242
      %v258 = vunpack.c.l.b16 %v243
      %v259 = vunpack.c.h.b16 %v243
      %v260 = vunpack.c.l.b16 %v244
      %v261 = vunpack.c.h.b16 %v244
      %v262 = vunpack.c.l.b16 %v245
      %v263 = vunpack.c.h.b16 %v245
      %v264 = vpack.c.b16 %v254, %v252
      %v265 = vpack.c.b16 %v255, %v253
      %v266 = vpack.c.b16 %v258, %v256
      %v267 = vpack.c.b16 %v259, %v257
      %v268 = vpack.c.b16 %v262, %v260
      %v269 = vpack.c.b16 %v263, %v261
      %vm276 = vcmask 392192
      %v278 = vsel %vm276, %v239, 0
      %280 = vmatpush.bf16.msra.mxu0 0
      %281 = vmatpush.bf16.msra.mxu0 0
      %282 = vmatpush.bf16.msra.mxu0 0
      %283 = vmatpush.bf16.msra.mxu0 0
      %284 = vmatpush.bf16.msra.mxu0 0
      %285 = vmatpush.bf16.msra.mxu0 %v268
      %286 = vmatpush.bf16.msra.mxu0 %v266
      %287 = vmatpush.bf16.msra.mxu0 %v264
      %288 = vmatmul.bf16.gmra.mxu0 %v278
      %v289 = vpop.f32.mrf.mxu0
      %v290 = vadd.f32 0.0, %v289
      %v291 = vpop.f32.mrf.mxu0
      %292 = vdwg.mxu0
      %293 = vmatpush.bf16.msra.mxu0 0
      %294 = vmatpush.bf16.msra.mxu0 0
      %295 = vmatpush.bf16.msra.mxu0 0
      %296 = vmatpush.bf16.msra.mxu0 0
      %297 = vmatpush.bf16.msra.mxu0 0
      %298 = vmatpush.bf16.msra.mxu0 %v269
      %299 = vmatpush.bf16.msra.mxu0 %v267
      %300 = vmatpush.bf16.msra.mxu0 %v265
      %301 = vmatmul.bf16.gmra.mxu0 %v278
      %v302 = vpop.f32.mrf.mxu0
      %v303 = vadd.f32 0.0, %v302
      %v304 = vpop.f32.mrf.mxu0
      %305 = vdwg.mxu0
      %s306 = sld [smem:[#allocation2]]
      %v307 = vstv %s306
      %v308 = vmul.f32 %v290, %v307
      %v309 = vmul.f32 %v303, %v307
      %v310 = vld [vmem:[%s2] sm:$0xff]
      %312 = vset.pattern.permute.xlu0 0
      %313 = vperm.xlu0 %312, %v310
      %v314 = vpop.permute.xlu0 %313
      %v316 = vadd.f32 %v308, %v314
      %v317 = vadd.f32 %v309, %v314
      %318 = vst [vmem:[%s236] sm:$0xff] %v316
      %319 = vst [vmem:[%s236 + $0x8] sm:$0xff] %v317
      %s320 = smul.u32 2, %s21
      %p321 = scmp.lt.s32.totalorder %s20, 1
      %s322 = scalar_select %p321, %s20, 1
      %p323 = scmp.lt.s32.totalorder %s320, 1
      %s324 = scalar_select %p323, %s320, 1
      %s325 = smul.addr %s322, 2
      %s326 = sadd.s32 %s324, %s325
      %s327 = smul.addr %s326, 8
      %s328 = scalar_lea.vmem %s4, %s327
      // Predicated region
      $region37: #{spectral_norm_conv_forward.3} parent=35 // pred_check
        %p329 = pneg %p139
      $region38: #{spectral_norm_conv_forward.3} parent=35 // pred_check_branch
        %331 = sbr.rel (%p329) target = $region40
      $region39: #{spectral_norm_conv_forward.3} parent=35 // pred_region
        %s332 = smul.u32 2, %s21
      $region40: #{spectral_norm_conv_forward.3} parent=35 // pred_fallthru
        _
    $region36: #{spectral_norm_conv_forward.3} parent=5 // pred_fallthru
      _
    %p333 = scmp.le.s32.totalorder 2, %s11
    // Predicated region
    $region41: #{spectral_norm_conv_forward.3} parent=5 // pred_check
      %p334 = pneg %p333
    $region42: #{spectral_norm_conv_forward.3} parent=5 // pred_check_branch
      %336 = sbr.rel (%p334) target = $region44
    $region43: #{spectral_norm_conv_forward.3} parent=5 // pred_region
      %s337 = ssub.s32 %s11, 2
      // Predicated region
      $region45: #{spectral_norm_conv_forward.3} parent=43 // pred_check
        %p338 = pneg %p145
      $region46: #{spectral_norm_conv_forward.3} parent=43 // pred_check_branch
        %340 = sbr.rel (%p338) target = $region48
      $region47: #{spectral_norm_conv_forward.3} parent=43 // pred_region
        %s341 = smul.u32 2, %s23
        %p342 = scmp.lt.s32.totalorder %s22, 1
        %s343 = scalar_select %p342, %s22, 1
        %p344 = scmp.lt.s32.totalorder %s341, 1
        %s345 = scalar_select %p344, %s341, 1
        %s346 = smul.addr %s343, 2
        %s347 = sadd.s32 %s345, %s346
        %s348 = smul.addr %s347, 8
        %s349 = scalar_lea.vmem %s4, %s348
      $region48: #{spectral_norm_conv_forward.3} parent=43 // pred_fallthru
        _
    $region44: #{spectral_norm_conv_forward.3} parent=5 // pred_fallthru
      _
  $region6: #{spectral_norm_conv_forward.3} parent=0 // loop_footer
    %s15 = sadd.s32 1, %s11
  $region7: #{spectral_norm_conv_forward.3} parent=0 // loop_footer_branch
    %10 = sbr.rel target = $region3
  $region8: #{spectral_norm_conv_forward.3} parent=0 // loop_exit
    _

</llo_original>
